<compile_context>
chip_gen: v6e
topology: v6e:2x2x1
jax: 0.10.0
libtpu: 0.0.40
codegen_flags: <defaults>
</compile_context>

<pallas_src>
import functools

import jax
import jax.numpy as jnp
from jax import lax
from jax.experimental import pallas as pl
from jax.experimental.pallas import tpu as pltpu


# ----------------------------- Pallas kernel ------------------------------

def _pool_kernel(sidx_ref, q_ref, vrow_ref, feat_ref, out_ref, *, neighbor_num):
    # sidx_ref : (TQ, 1) int32  -- global vertex id of each sampled (query) row
    # q_ref    : (TQ, 3) f32    -- sampled query rows, pre-scaled by -2
    # vrow_ref : (8, V)  f32    -- lane-dense rows [x, y, z, |v|^2, 0, 0, 0, 0]
    # feat_ref : (V, C)         -- full feature map for this batch element
    # out_ref  : (TQ, C)        -- max-pooled features at the sampled vertices
    q = q_ref[...]
    sidx = sidx_ref[...]
    feat = feat_ref[...]

    vx = vrow_ref[0:1, :]
    vy = vrow_ref[1:2, :]
    vz = vrow_ref[2:3, :]
    vsq = vrow_ref[3:4, :]

    TQ = q.shape[0]
    V = feat.shape[0]
    C = feat.shape[1]

    # d[r, j] = -2 <q_r, v_j> + |v_j|^2  (the per-row +|q_r|^2 constant never
    # changes which columns are nearest, so it is dropped).  Pure VPU broadcast
    # FMAs over (TQ, V); the MXU slot is left free for the gather matmuls.
    d = vsq + q[:, 0:1] * vx + q[:, 1:2] * vy + q[:, 2:3] * vz          # (TQ, V)

    col_ids = lax.broadcasted_iota(jnp.int32, (TQ, V), 1)
    inf = jnp.float32(jnp.inf)
    # Exclude self (mirrors the reference's `topk(...)[:, :, 1:]` slice).
    d_work = jnp.where(col_ids == sidx, inf, d)
    running = jnp.full((TQ, C), -jnp.inf, dtype=jnp.float32)

    def one_neighbor(carry):
        running, d_work = carry
        row_min = jnp.min(d_work, axis=-1, keepdims=True)               # (TQ, 1)
        sel = jnp.min(jnp.where(d_work <= row_min, col_ids, V),
                      axis=-1, keepdims=True)                           # (TQ, 1)
        hit = col_ids == sel                                            # (TQ, V)
        # Exact {0,1} gather on the MXU; one-hot built in the feature dtype so a
        # bf16 feature map runs the full-rate bf16 path (accumulation stays f32).
        onehot = hit.astype(feat.dtype)
        gathered = jnp.dot(onehot, feat, preferred_element_type=jnp.float32)
        return jnp.maximum(running, gathered), jnp.where(hit, inf, d_work)

    carry = (running, d_work)
    if neighbor_num <= 8:
        for _ in range(neighbor_num):          # short static unroll
            carry = one_neighbor(carry)
    else:
        carry = lax.fori_loop(0, neighbor_num, lambda _, c: one_neighbor(c),
                              carry, unroll=2)

    out_ref[...] = carry[0].astype(out_ref.dtype)


# ------------------------------ Module glue -------------------------------

def _device_kind() -> str:
    try:
        return jax.devices()[0].device_kind.lower()
    except Exception:
        return ""


def _choose_row_tile(pool_num: int) -> int:
    # Block rows must be a multiple of 8 or the full extent.
    if pool_num % 8 != 0:
        return pool_num
    # v5e MXU is 4x128x128 with the smallest scoped VMEM -> prefer 128 rows;
    # v6e / v7x MXUs are 2x256x256 -> prefer 256 rows.
    prefs = (128, 256, 64, 32, 16, 8) if "v5" in _device_kind() \
        else (256, 128, 64, 32, 16, 8)
    for t in prefs:
        if pool_num % t == 0:
            return t
    return pool_num


@functools.partial(jax.jit, static_argnames=("neighbor_num",))
def pool_layer_pallas(vertices, feature_map, sample_idx, *, neighbor_num=4):
    """Pool_layer.forward.

    vertices:    (bs, V, 3) f32
    feature_map: (bs, V, C) f32 or bf16
    sample_idx:  (pool_num,) int32 -- the randperm(V)[:pool_num] subsample
                 (passed in explicitly since torch.randperm uses global RNG).

    Returns (vertices_pool (bs, pool_num, 3), feature_map_pool (bs, pool_num, C)).
    """
    bs, V, _ = vertices.shape
    C = feature_map.shape[-1]
    pool_num = int(sample_idx.shape[0])
    assert V > neighbor_num, "need at least neighbor_num + 1 vertices"
    sample_idx = sample_idx.astype(jnp.int32)

    # The random subsample commutes with the per-vertex neighbour max-pool, so
    # only the pool_num sampled rows are ever computed or written back.
    vertices_pool = jnp.take(vertices, sample_idx, axis=1)              # (bs, P, 3)

    f32 = jnp.float32
    verts = vertices.astype(f32)
    # Lane-dense vertex slab: rows [x, y, z, |v|^2], zero-padded to 8 sublanes,
    # so the HBM->VMEM DMA is dense and no transpose happens in-kernel.
    sq = jnp.sum(verts * verts, axis=-1)                                 # (bs, V)
    vrow = jnp.concatenate(
        [jnp.transpose(verts, (0, 2, 1)),                                # (bs, 3, V)
         sq[:, None, :],                                                 # (bs, 1, V)
         jnp.zeros((bs, 4, V), f32)], axis=1)                            # (bs, 8, V)
    q = (-2.0 * vertices_pool).astype(f32)                               # (bs, P, 3)
    sidx2d = sample_idx.reshape(pool_num, 1)

    TQ = _choose_row_tile(pool_num)
    grid = (bs, pool_num // TQ)

    # ----- VMEM budget & buffering -----
    vmem_cap = (56 << 20) if "v7" in _device_kind() else (100 << 20)
    feat_itemsize = jnp.dtype(feature_map.dtype).itemsize
    feat_block = V * C * feat_itemsize
    vrow_block = 8 * V * 4
    small_blocks = TQ * 3 * 4 + TQ * 4 + TQ * C * feat_itemsize
    temporaries = 8 * TQ * V * 4             # d_work, masks, iota, one-hot, slack
    need = 2 * (feat_block + vrow_block + small_blocks) + temporaries + (4 << 20)
    single_buffer_big = need > vmem_cap
    if single_buffer_big:
        # feat / vrow block indices only change at batch transitions, so
        # single-buffering them exposes just one DMA per batch element while
        # halving their VMEM footprint (matters on v7x's 64 MiB VMEM).
        need = (feat_block + vrow_block) + 2 * small_blocks + temporaries + (4 << 20)
    vmem_limit = int(min(max(need, 32 << 20), vmem_cap))
    big_kwargs = dict(pipeline_mode=pl.Buffered(1)) if single_buffer_big else {}

    # Bias the megacore split to the batch axis so both TensorCores never DMA
    # the same (V, C) feature block; if bs == 1, let the row-tile axis split.
    dims = ("parallel", "arbitrary") if bs > 1 else ("parallel", "parallel")

    kernel = functools.partial(_pool_kernel, neighbor_num=neighbor_num)
    feature_map_pool = pl.pallas_call(
        kernel,
        out_shape=jax.ShapeDtypeStruct((bs, pool_num, C), feature_map.dtype),
        grid=grid,
        in_specs=[
            pl.BlockSpec((TQ, 1), lambda b, t: (t, 0)),                  # sample ids
            pl.BlockSpec((None, TQ, 3), lambda b, t: (b, t, 0)),         # -2 * queries
            pl.BlockSpec((None, 8, V), lambda b, t: (b, 0, 0), **big_kwargs),
            pl.BlockSpec((None, V, C), lambda b, t: (b, 0, 0), **big_kwargs),
        ],
        out_specs=pl.BlockSpec((None, TQ, C), lambda b, t: (b, t, 0)),
        compiler_params=pltpu.CompilerParams(
            dimension_semantics=dims, vmem_limit_bytes=vmem_limit),
    )(sidx2d, q, vrow, feature_map)

    return vertices_pool, feature_map_pool


# --------------------------- Pure-JAX reference ----------------------------

def reference_pool(vertices, feature_map, sample_idx, neighbor_num):
    # get_neighbor_index
    inner = jnp.einsum("bvd,bwd->bvw", vertices, vertices)
    quad = jnp.sum(vertices ** 2, axis=2)
    distance = -2.0 * inner + quad[:, None, :] + quad[:, :, None]
    _, nbr_idx = jax.lax.top_k(-distance, neighbor_num + 1)   # k+1 smallest dists
    nbr_idx = nbr_idx[:, :, 1:]
    # indexing_neighbor + max over neighbours
    nbr_feat = jax.vmap(lambda f, ix: f[ix])(feature_map, nbr_idx)  # (bs,V,k,C)
    pooled = jnp.max(nbr_feat, axis=2)
    # random subsample
    vertices_pool = vertices[:, sample_idx, :]
    feature_map_pool = pooled[:, sample_idx, :]
    return vertices_pool, feature_map_pool


# ---------------------------------- main -----------------------------------

if __name__ == "__main__":
    bs, V, C = 2, 16, 32
    pooling_rate, neighbor_num = 4, 4
    pool_num = V // pooling_rate

    root = jax.random.PRNGKey(0)
    kv, kf, kp = jax.random.split(root, 3)
    vertices = jax.random.normal(kv, (bs, V, 3), jnp.float32)
    feature_map = jax.random.normal(kf, (bs, V, C), jnp.float32)
    # TODO(synk): torch.randperm uses the framework's global RNG; the permutation
    # is drawn from an explicit key here and passed in for determinism.
    sample_idx = jax.random.permutation(kp, V)[:pool_num].astype(jnp.int32)

    v_pool, f_pool = pool_layer_pallas(
        vertices, feature_map, sample_idx, neighbor_num=neighbor_num)
    v_pool = jax.block_until_ready(v_pool)
    f_pool = jax.block_until_ready(f_pool)

    ref_v, ref_f = reference_pool(vertices, feature_map, sample_idx, neighbor_num)

    assert v_pool.shape == (bs, pool_num, 3)
    assert f_pool.shape == (bs, pool_num, C)
    assert jnp.allclose(v_pool, ref_v, atol=1e-6, rtol=1e-6)
    assert jnp.allclose(f_pool, ref_f, atol=1e-5, rtol=1e-5)

    print("KERNEL_OK")
</pallas_src>

<mosaic_0001>
module attributes {stable_mosaic.version = 11 : i64} {
  func.func @_pool_kernel(%arg0: i32, %arg1: i32, %arg2: memref<4x1xi32, #tpu.memory_space<vmem>>, %arg3: memref<1x4x3xf32, #tpu.memory_space<vmem>>, %arg4: memref<1x8x16xf32, #tpu.memory_space<vmem>>, %arg5: memref<1x16x32xf32, #tpu.memory_space<vmem>>, %arg6: memref<1x4x32xf32, #tpu.memory_space<vmem>>) attributes {dimension_semantics = [#tpu.dimension_semantics<parallel>, #tpu.dimension_semantics<arbitrary>], iteration_bounds = array<i64: 2, 1>, scalar_prefetch = 0 : i64, scratch_operands = 0 : i64, tpu.core_type = #tpu.core_type<tc>, window_params = [{transform_indices = @transform_0, window_bounds = array<i64: 4, 1>}, {transform_indices = @transform_1, window_bounds = array<i64: 1, 4, 3>}, {transform_indices = @transform_2, window_bounds = array<i64: 1, 8, 16>}, {transform_indices = @transform_3, window_bounds = array<i64: 1, 16, 32>}, {transform_indices = @transform_4, window_bounds = array<i64: 1, 4, 32>}]} {
    %c0 = arith.constant 0 : index
    %c0_0 = arith.constant 0 : index
    %c0_1 = arith.constant 0 : index
    %0 = vector.load %arg3[%c0, %c0_0, %c0_1] : memref<1x4x3xf32, #tpu.memory_space<vmem>>, vector<1x4x3xf32>
    %1 = vector.shape_cast %0 : vector<1x4x3xf32> to vector<4x3xf32>
    %c0_2 = arith.constant 0 : index
    %c0_3 = arith.constant 0 : index
    %2 = vector.load %arg2[%c0_2, %c0_3] : memref<4x1xi32, #tpu.memory_space<vmem>>, vector<4x1xi32>
    %c0_4 = arith.constant 0 : index
    %c0_5 = arith.constant 0 : index
    %c0_6 = arith.constant 0 : index
    %3 = vector.load %arg5[%c0_4, %c0_5, %c0_6] : memref<1x16x32xf32, #tpu.memory_space<vmem>>, vector<1x16x32xf32>
    %4 = vector.shape_cast %3 : vector<1x16x32xf32> to vector<16x32xf32>
    %c0_7 = arith.constant 0 : index
    %c0_8 = arith.constant 0 : index
    %c0_9 = arith.constant 0 : index
    %5 = vector.load %arg4[%c0_7, %c0_8, %c0_9] : memref<1x8x16xf32, #tpu.memory_space<vmem>>, vector<1x1x16xf32>
    %6 = vector.shape_cast %5 : vector<1x1x16xf32> to vector<1x16xf32>
    %c0_10 = arith.constant 0 : index
    %c1 = arith.constant 1 : index
    %c0_11 = arith.constant 0 : index
    %7 = vector.load %arg4[%c0_10, %c1, %c0_11] : memref<1x8x16xf32, #tpu.memory_space<vmem>>, vector<1x1x16xf32>
    %8 = vector.shape_cast %7 : vector<1x1x16xf32> to vector<1x16xf32>
    %c0_12 = arith.constant 0 : index
    %c2 = arith.constant 2 : index
    %c0_13 = arith.constant 0 : index
    %9 = vector.load %arg4[%c0_12, %c2, %c0_13] : memref<1x8x16xf32, #tpu.memory_space<vmem>>, vector<1x1x16xf32>
    %10 = vector.shape_cast %9 : vector<1x1x16xf32> to vector<1x16xf32>
    %c0_14 = arith.constant 0 : index
    %c3 = arith.constant 3 : index
    %c0_15 = arith.constant 0 : index
    %11 = vector.load %arg4[%c0_14, %c3, %c0_15] : memref<1x8x16xf32, #tpu.memory_space<vmem>>, vector<1x1x16xf32>
    %12 = vector.shape_cast %11 : vector<1x1x16xf32> to vector<1x16xf32>
    %13 = vector.extract_strided_slice %1 {offsets = [0, 0], sizes = [4, 1], strides = [1, 1]} : vector<4x3xf32> to vector<4x1xf32>
    %14 = vector.broadcast %13 : vector<4x1xf32> to vector<4x16xf32>
    %15 = vector.broadcast %6 : vector<1x16xf32> to vector<4x16xf32>
    %16 = arith.mulf %14, %15 : vector<4x16xf32>
    %17 = vector.broadcast %12 : vector<1x16xf32> to vector<4x16xf32>
    %18 = arith.addf %17, %16 : vector<4x16xf32>
    %19 = vector.extract_strided_slice %1 {offsets = [0, 1], sizes = [4, 1], strides = [1, 1]} : vector<4x3xf32> to vector<4x1xf32>
    %20 = vector.broadcast %19 : vector<4x1xf32> to vector<4x16xf32>
    %21 = vector.broadcast %8 : vector<1x16xf32> to vector<4x16xf32>
    %22 = arith.mulf %20, %21 : vector<4x16xf32>
    %23 = arith.addf %18, %22 : vector<4x16xf32>
    %24 = vector.extract_strided_slice %1 {offsets = [0, 2], sizes = [4, 1], strides = [1, 1]} : vector<4x3xf32> to vector<4x1xf32>
    %25 = vector.broadcast %24 : vector<4x1xf32> to vector<4x16xf32>
    %26 = vector.broadcast %10 : vector<1x16xf32> to vector<4x16xf32>
    %27 = arith.mulf %25, %26 : vector<4x16xf32>
    %28 = arith.addf %23, %27 : vector<4x16xf32>
    %29 = tpu.iota {dimensions = array<i32: 1>} : vector<4x16xi32>
    %30 = vector.broadcast %2 : vector<4x1xi32> to vector<4x16xi32>
    %31 = arith.cmpi eq, %29, %30 : vector<4x16xi32>
    %cst = arith.constant 0x7F800000 : f32
    %32 = vector.broadcast %cst : f32 to vector<4x16xf32>
    %33 = arith.select %31, %32, %28 : vector<4x16xi1>, vector<4x16xf32>
    %cst_16 = arith.constant 0xFF800000 : f32
    %34 = vector.broadcast %cst_16 : f32 to vector<4x32xf32>
    %cst_17 = arith.constant dense<0x7F800000> : vector<4xf32>
    %35 = vector.multi_reduction <minimumf>, %33, %cst_17 [1] : vector<4x16xf32> to vector<4xf32>
    %36 = vector.shape_cast %35 : vector<4xf32> to vector<4x1xf32>
    %37 = vector.broadcast %36 : vector<4x1xf32> to vector<4x16xf32>
    %38 = arith.cmpf ole, %33, %37 : vector<4x16xf32>
    %c16_i32 = arith.constant 16 : i32
    %39 = vector.broadcast %c16_i32 : i32 to vector<4x16xi32>
    %40 = arith.select %38, %29, %39 : vector<4x16xi1>, vector<4x16xi32>
    %cst_18 = arith.constant dense<2147483647> : vector<4xi32>
    %41 = vector.multi_reduction <minsi>, %40, %cst_18 [1] : vector<4x16xi32> to vector<4xi32>
    %42 = vector.shape_cast %41 : vector<4xi32> to vector<4x1xi32>
    %43 = vector.broadcast %42 : vector<4x1xi32> to vector<4x16xi32>
    %44 = arith.cmpi eq, %29, %43 : vector<4x16xi32>
    %45 = arith.extui %44 : vector<4x16xi1> to vector<4x16xi32>
    %46 = arith.sitofp %45 : vector<4x16xi32> to vector<4x16xf32>
    %cst_19 = arith.constant dense<0.000000e+00> : vector<4x32xf32>
    %47 = tpu.matmul %46, %4, %cst_19 {dimension_numbers = #tpu.dot_dimension_numbers<[1], [0], [0], [1], [0, 0, 1, 1], [], []>} : vector<4x16xf32>, vector<16x32xf32>, vector<4x32xf32> -> vector<4x32xf32>
    %48 = arith.maximumf %34, %47 : vector<4x32xf32>
    %cst_20 = arith.constant 0x7F800000 : f32
    %49 = vector.broadcast %cst_20 : f32 to vector<4x16xf32>
    %50 = arith.select %44, %49, %33 : vector<4x16xi1>, vector<4x16xf32>
    %cst_21 = arith.constant dense<0x7F800000> : vector<4xf32>
    %51 = vector.multi_reduction <minimumf>, %50, %cst_21 [1] : vector<4x16xf32> to vector<4xf32>
    %52 = vector.shape_cast %51 : vector<4xf32> to vector<4x1xf32>
    %53 = vector.broadcast %52 : vector<4x1xf32> to vector<4x16xf32>
    %54 = arith.cmpf ole, %50, %53 : vector<4x16xf32>
    %c16_i32_22 = arith.constant 16 : i32
    %55 = vector.broadcast %c16_i32_22 : i32 to vector<4x16xi32>
    %56 = arith.select %54, %29, %55 : vector<4x16xi1>, vector<4x16xi32>
    %cst_23 = arith.constant dense<2147483647> : vector<4xi32>
    %57 = vector.multi_reduction <minsi>, %56, %cst_23 [1] : vector<4x16xi32> to vector<4xi32>
    %58 = vector.shape_cast %57 : vector<4xi32> to vector<4x1xi32>
    %59 = vector.broadcast %58 : vector<4x1xi32> to vector<4x16xi32>
    %60 = arith.cmpi eq, %29, %59 : vector<4x16xi32>
    %61 = arith.extui %60 : vector<4x16xi1> to vector<4x16xi32>
    %62 = arith.sitofp %61 : vector<4x16xi32> to vector<4x16xf32>
    %cst_24 = arith.constant dense<0.000000e+00> : vector<4x32xf32>
    %63 = tpu.matmul %62, %4, %cst_24 {dimension_numbers = #tpu.dot_dimension_numbers<[1], [0], [0], [1], [0, 0, 1, 1], [], []>} : vector<4x16xf32>, vector<16x32xf32>, vector<4x32xf32> -> vector<4x32xf32>
    %64 = arith.maximumf %48, %63 : vector<4x32xf32>
    %cst_25 = arith.constant 0x7F800000 : f32
    %65 = vector.broadcast %cst_25 : f32 to vector<4x16xf32>
    %66 = arith.select %60, %65, %50 : vector<4x16xi1>, vector<4x16xf32>
    %cst_26 = arith.constant dense<0x7F800000> : vector<4xf32>
    %67 = vector.multi_reduction <minimumf>, %66, %cst_26 [1] : vector<4x16xf32> to vector<4xf32>
    %68 = vector.shape_cast %67 : vector<4xf32> to vector<4x1xf32>
    %69 = vector.broadcast %68 : vector<4x1xf32> to vector<4x16xf32>
    %70 = arith.cmpf ole, %66, %69 : vector<4x16xf32>
    %c16_i32_27 = arith.constant 16 : i32
    %71 = vector.broadcast %c16_i32_27 : i32 to vector<4x16xi32>
    %72 = arith.select %70, %29, %71 : vector<4x16xi1>, vector<4x16xi32>
    %cst_28 = arith.constant dense<2147483647> : vector<4xi32>
    %73 = vector.multi_reduction <minsi>, %72, %cst_28 [1] : vector<4x16xi32> to vector<4xi32>
    %74 = vector.shape_cast %73 : vector<4xi32> to vector<4x1xi32>
    %75 = vector.broadcast %74 : vector<4x1xi32> to vector<4x16xi32>
    %76 = arith.cmpi eq, %29, %75 : vector<4x16xi32>
    %77 = arith.extui %76 : vector<4x16xi1> to vector<4x16xi32>
    %78 = arith.sitofp %77 : vector<4x16xi32> to vector<4x16xf32>
    %cst_29 = arith.constant dense<0.000000e+00> : vector<4x32xf32>
    %79 = tpu.matmul %78, %4, %cst_29 {dimension_numbers = #tpu.dot_dimension_numbers<[1], [0], [0], [1], [0, 0, 1, 1], [], []>} : vector<4x16xf32>, vector<16x32xf32>, vector<4x32xf32> -> vector<4x32xf32>
    %80 = arith.maximumf %64, %79 : vector<4x32xf32>
    %cst_30 = arith.constant 0x7F800000 : f32
    %81 = vector.broadcast %cst_30 : f32 to vector<4x16xf32>
    %82 = arith.select %76, %81, %66 : vector<4x16xi1>, vector<4x16xf32>
    %cst_31 = arith.constant dense<0x7F800000> : vector<4xf32>
    %83 = vector.multi_reduction <minimumf>, %82, %cst_31 [1] : vector<4x16xf32> to vector<4xf32>
    %84 = vector.shape_cast %83 : vector<4xf32> to vector<4x1xf32>
    %85 = vector.broadcast %84 : vector<4x1xf32> to vector<4x16xf32>
    %86 = arith.cmpf ole, %82, %85 : vector<4x16xf32>
    %c16_i32_32 = arith.constant 16 : i32
    %87 = vector.broadcast %c16_i32_32 : i32 to vector<4x16xi32>
    %88 = arith.select %86, %29, %87 : vector<4x16xi1>, vector<4x16xi32>
    %cst_33 = arith.constant dense<2147483647> : vector<4xi32>
    %89 = vector.multi_reduction <minsi>, %88, %cst_33 [1] : vector<4x16xi32> to vector<4xi32>
    %90 = vector.shape_cast %89 : vector<4xi32> to vector<4x1xi32>
    %91 = vector.broadcast %90 : vector<4x1xi32> to vector<4x16xi32>
    %92 = arith.cmpi eq, %29, %91 : vector<4x16xi32>
    %93 = arith.extui %92 : vector<4x16xi1> to vector<4x16xi32>
    %94 = arith.sitofp %93 : vector<4x16xi32> to vector<4x16xf32>
    %cst_34 = arith.constant dense<0.000000e+00> : vector<4x32xf32>
    %95 = tpu.matmul %94, %4, %cst_34 {dimension_numbers = #tpu.dot_dimension_numbers<[1], [0], [0], [1], [0, 0, 1, 1], [], []>} : vector<4x16xf32>, vector<16x32xf32>, vector<4x32xf32> -> vector<4x32xf32>
    %96 = arith.maximumf %80, %95 : vector<4x32xf32>
    %c0_35 = arith.constant 0 : index
    %c0_36 = arith.constant 0 : index
    %c0_37 = arith.constant 0 : index
    %97 = vector.load %arg6[%c0_35, %c0_36, %c0_37] : memref<1x4x32xf32, #tpu.memory_space<vmem>>, vector<1x4x32xf32>
    %98 = vector.shape_cast %97 : vector<1x4x32xf32> to vector<4x32xf32>
    %99 = vector.shape_cast %96 : vector<4x32xf32> to vector<1x4x32xf32>
    tpu.vector_store %arg6[%c0_35, %c0_36, %c0_37], %99 {strides = array<i32>} : memref<1x4x32xf32, #tpu.memory_space<vmem>>, vector<1x4x32xf32>,
    return
  }
  func.func @transform_0(%arg0: i32, %arg1: i32) -> (i32, i32) {
    %c0_i32 = arith.constant 0 : i32
    %c0_i32_0 = arith.constant 0 : i32
    return %arg1, %c0_i32 : i32, i32
  }
  func.func @transform_1(%arg0: i32, %arg1: i32) -> (i32, i32, i32) {
    %c0_i32 = arith.constant 0 : i32
    %c0_i32_0 = arith.constant 0 : i32
    return %arg0, %arg1, %c0_i32 : i32, i32, i32
  }
  func.func @transform_2(%arg0: i32, %arg1: i32) -> (i32, i32, i32) {
    %c0_i32 = arith.constant 0 : i32
    %c0_i32_0 = arith.constant 0 : i32
    %c0_i32_1 = arith.constant 0 : i32
    return %arg0, %c0_i32, %c0_i32_0 : i32, i32, i32
  }
  func.func @transform_3(%arg0: i32, %arg1: i32) -> (i32, i32, i32) {
    %c0_i32 = arith.constant 0 : i32
    %c0_i32_0 = arith.constant 0 : i32
    %c0_i32_1 = arith.constant 0 : i32
    return %arg0, %c0_i32, %c0_i32_0 : i32, i32, i32
  }
  func.func @transform_4(%arg0: i32, %arg1: i32) -> (i32, i32, i32) {
    %c0_i32 = arith.constant 0 : i32
    %c0_i32_0 = arith.constant 0 : i32
    return %arg0, %arg1, %c0_i32 : i32, i32, i32
  }
}

</mosaic_0001>

<llo_original>
// kernel: pool_layer_pallas.1
$region0: #{pool_layer_pallas.1}
  #allocation0 [shape = 'u32[]', space=smem, size = 0x4, offset = 0x4, fixed_abs, tag = 'smem constant byte address 0x4 - core index']
  #allocation1 [shape = 'u32[144,128]{1,0:T(1,128)}', space=vmem, size = 0x12000, scoped, tag = 'internal scratch']
  %s0 = inlined_call_operand.vmem [shape: s32[4,1], index: 0, kind: input, shape index: {}]
  %s1 = inlined_call_operand.vmem [shape: f32[2,4,3], index: 1, kind: input, shape index: {}]
  %s2 = inlined_call_operand.vmem [shape: f32[2,8,16], index: 2, kind: input, shape index: {}]
  %s3 = inlined_call_operand.vmem [shape: f32[2,16,32], index: 3, kind: input, shape index: {}]
  %s4 = inlined_call_operand.hbm [shape: f32[2,4,32], index: 4, kind: output, shape index: {}]
  %s5 = sld [smem:[#allocation0]]
  $region49: #{pool_layer_pallas.1} parent=0
    _
  %s7 = ssub.s32 1, %s5
  %s8 = scalar_select 0, %s7, %s5
  $region1: #{pool_layer_pallas.1} parent=0
    #allocation2 [shape = 'u8[4096]{0}', space=vmem, size = 0x1000, scoped, tag = 'output window, operand 0']
    #allocation3 [shape = 's32[2]{0}', space=sflag, size = 0x8, scoped, tag = 'scoped memory for pool_layer_pallas.1']
    %9 = vsyncpa [#allocation3], 0
    %s10 = scalar_lea.sflag [#allocation3], 1
    %11 = vsyncpa %s10, 0
    loop: start=0, step=1, limit=4
    $region2: #{pool_layer_pallas.1} parent=1 // loop_pre_header
      _
    $region3: #{pool_layer_pallas.1} parent=1 // loop_header
      %s13 = sphi 0, %s17
      %p14 = scmp.ge.s32.totalorder %s13, 4
      %s20 = sphi 0, %s32
      %s21 = sphi 0, %s28
      %s22 = sphi 0, %s20
      %s23 = sphi 0, %s21
      %s24 = sphi 0, %s22
      %s25 = sphi 0, %s23
      %s35 = sphi 0, %s37
      %s38 = sphi 0, %s35
      %s39 = sphi 0, %s38
      %s55 = sphi 0, %s39
      %s63 = sphi 0, %s65
      %s66 = sphi 0, %s63
      %s67 = sphi 0, %s66
      %s83 = sphi 0, %s67
      %s89 = sphi 0, %s91
      %s92 = sphi 0, %s89
      %s93 = sphi 0, %s92
      %s109 = sphi 0, %s93
      %s115 = sphi 0, %s117
      %s118 = sphi 0, %s115
      %s119 = sphi 0, %s118
      %s135 = sphi 0, %s119
      %s143 = sphi 0, %s145
      %s146 = sphi 0, %s143
      %s147 = sphi 0, %s146
      %s163 = sphi 0, %s147
    $region4: #{pool_layer_pallas.1} parent=1 // loop_header_branch
      %16 = sbr.rel (%p14) target = $region8
    $region5: #{pool_layer_pallas.1} parent=1 // loop_body
      %s18 = ssub.s32 %s13, 1
      %s19 = ssub.s32 %s13, 2
      %s26 = sadd.s32 1, %s21
      %p27 = scmp.ge.s32.totalorder %s26, 1
      %s28 = scalar_select %p27, 0, %s26
      %s29 = sadd.s32 1, %s20
      %s30 = scalar_select %p27, %s29, %s20
      %p31 = scmp.ge.s32.totalorder %s30, 2
      %s32 = scalar_select %p31, 0, %s30
      %s33 = ssub.s32 %s21, %s28
      %p34 = scmp.eq.s32.totalorder %s33, 0
      %s36 = sadd.s32 %s35, 1
      %s37 = scalar_select %p34, %s35, %s36
      %p40 = pneg %p34
      %p41 = scmp.eq.s32.totalorder %s13, 1
      %p42 = por %p40, %p41
      %p43 = scmp.ne.s32.totalorder %s35, %s38
      %p44 = scmp.eq.s32.totalorder %s13, 0
      %p45 = por %p43, %p44
      %p46 = scmp.ne.s32.totalorder %s35, %s38
      %p47 = scmp.eq.s32.totalorder %s18, 1
      %p48 = por %p46, %p47
      %p49 = scmp.ne.s32.totalorder %s38, %s39
      %p50 = scmp.eq.s32.totalorder %s18, 0
      %p51 = por %p49, %p50
      %p52 = scmp.ne.s32.totalorder %s38, %s39
      %p53 = scmp.eq.s32.totalorder %s19, 1
      %p54 = por %p52, %p53
      %p56 = scmp.ne.s32.totalorder %s39, %s55
      %p57 = scmp.eq.s32.totalorder %s19, 0
      %p58 = por %p56, %p57
      %s59 = ssub.s32 %s20, %s32
      %s60 = ssub.s32 %s21, %s28
      %s61 = sor.u32 %s59, %s60
      %p62 = scmp.eq.s32.totalorder %s61, 0
      %s64 = sadd.s32 %s63, 1
      %s65 = scalar_select %p62, %s63, %s64
      %p68 = pneg %p62
      %p69 = scmp.eq.s32.totalorder %s13, 1
      %p70 = por %p68, %p69
      %p71 = scmp.ne.s32.totalorder %s63, %s66
      %p72 = scmp.eq.s32.totalorder %s13, 0
      %p73 = por %p71, %p72
      %p74 = scmp.ne.s32.totalorder %s63, %s66
      %p75 = scmp.eq.s32.totalorder %s18, 1
      %p76 = por %p74, %p75
      %p77 = scmp.ne.s32.totalorder %s66, %s67
      %p78 = scmp.eq.s32.totalorder %s18, 0
      %p79 = por %p77, %p78
      %p80 = scmp.ne.s32.totalorder %s66, %s67
      %p81 = scmp.eq.s32.totalorder %s19, 1
      %p82 = por %p80, %p81
      %p84 = scmp.ne.s32.totalorder %s67, %s83
      %p85 = scmp.eq.s32.totalorder %s19, 0
      %p86 = por %p84, %p85
      %s87 = ssub.s32 %s20, %s32
      %p88 = scmp.eq.s32.totalorder %s87, 0
      %s90 = sadd.s32 %s89, 1
      %s91 = scalar_select %p88, %s89, %s90
      %p94 = pneg %p88
      %p95 = scmp.eq.s32.totalorder %s13, 1
      %p96 = por %p94, %p95
      %p97 = scmp.ne.s32.totalorder %s89, %s92
      %p98 = scmp.eq.s32.totalorder %s13, 0
      %p99 = por %p97, %p98
      %p100 = scmp.ne.s32.totalorder %s89, %s92
      %p101 = scmp.eq.s32.totalorder %s18, 1
      %p102 = por %p100, %p101
      %p103 = scmp.ne.s32.totalorder %s92, %s93
      %p104 = scmp.eq.s32.totalorder %s18, 0
      %p105 = por %p103, %p104
      %p106 = scmp.ne.s32.totalorder %s92, %s93
      %p107 = scmp.eq.s32.totalorder %s19, 1
      %p108 = por %p106, %p107
      %p110 = scmp.ne.s32.totalorder %s93, %s109
      %p111 = scmp.eq.s32.totalorder %s19, 0
      %p112 = por %p110, %p111
      %s113 = ssub.s32 %s20, %s32
      %p114 = scmp.eq.s32.totalorder %s113, 0
      %s116 = sadd.s32 %s115, 1
      %s117 = scalar_select %p114, %s115, %s116
      %p120 = pneg %p114
      %p121 = scmp.eq.s32.totalorder %s13, 1
      %p122 = por %p120, %p121
      %p123 = scmp.ne.s32.totalorder %s115, %s118
      %p124 = scmp.eq.s32.totalorder %s13, 0
      %p125 = por %p123, %p124
      %p126 = scmp.ne.s32.totalorder %s115, %s118
      %p127 = scmp.eq.s32.totalorder %s18, 1
      %p128 = por %p126, %p127
      %p129 = scmp.ne.s32.totalorder %s118, %s119
      %p130 = scmp.eq.s32.totalorder %s18, 0
      %p131 = por %p129, %p130
      %p132 = scmp.ne.s32.totalorder %s118, %s119
      %p133 = scmp.eq.s32.totalorder %s19, 1
      %p134 = por %p132, %p133
      %p136 = scmp.ne.s32.totalorder %s119, %s135
      %p137 = scmp.eq.s32.totalorder %s19, 0
      %p138 = por %p136, %p137
      %s139 = ssub.s32 %s20, %s32
      %s140 = ssub.s32 %s21, %s28
      %s141 = sor.u32 %s139, %s140
      %p142 = scmp.eq.s32.totalorder %s141, 0
      %s144 = sadd.s32 %s143, 1
      %s145 = scalar_select %p142, %s143, %s144
      %p148 = pneg %p142
      %p149 = scmp.eq.s32.totalorder %s13, 1
      %p150 = por %p148, %p149
      %p151 = scmp.ne.s32.totalorder %s143, %s146
      %p152 = scmp.eq.s32.totalorder %s13, 0
      %p153 = por %p151, %p152
      %p154 = scmp.ne.s32.totalorder %s143, %s146
      %p155 = scmp.eq.s32.totalorder %s18, 1
      %p156 = por %p154, %p155
      %p157 = scmp.ne.s32.totalorder %s146, %s147
      %p158 = scmp.eq.s32.totalorder %s18, 0
      %p159 = por %p157, %p158
      %p160 = scmp.ne.s32.totalorder %s146, %s147
      %p161 = scmp.eq.s32.totalorder %s19, 1
      %p162 = por %p160, %p161
      %p164 = scmp.ne.s32.totalorder %s147, %s163
      %p165 = scmp.eq.s32.totalorder %s19, 0
      %p166 = por %p164, %p165
      %p167 = scmp.le.s32.totalorder 1, %s13
      %p168 = scmp.lt.s32.totalorder %s13, 3
      %p169 = pnand %p167, %p168
      %p170 = pneg %p169
      // Predicated region
      $region9: #{pool_layer_pallas.1} parent=5 // pred_check
        _
      $region10: #{pool_layer_pallas.1} parent=5 // pred_check_branch
        %172 = sbr.rel (%p169) target = $region12
      $region11: #{pool_layer_pallas.1} parent=5 // pred_region
        %s173 = ssub.s32 %s13, 1
        // Predicated region
        $region13: #{pool_layer_pallas.1} parent=11 // pred_check
          %p174 = pneg %p51
        $region14: #{pool_layer_pallas.1} parent=11 // pred_check_branch
          %176 = sbr.rel (%p174) target = $region16
        $region15: #{pool_layer_pallas.1} parent=11 // pred_region
          %p177 = scmp.lt.s32.totalorder %s23, 0
          %s178 = scalar_select %p177, %s23, 0
          %s179 = smul.addr %s178, 4
          %s180 = scalar_lea.vmem %s0, %s179
        $region16: #{pool_layer_pallas.1} parent=11 // pred_fallthru
          _
      $region12: #{pool_layer_pallas.1} parent=5 // pred_fallthru
        _
      %p181 = scmp.lt.s32.totalorder %s13, 2
      // Predicated region
      $region17: #{pool_layer_pallas.1} parent=5 // pred_check
        %p182 = pneg %p181
      $region18: #{pool_layer_pallas.1} parent=5 // pred_check_branch
        %184 = sbr.rel (%p182) target = $region20
      $region19: #{pool_layer_pallas.1} parent=5 // pred_region
        // Predicated region
        $region21: #{pool_layer_pallas.1} parent=19 // pred_check
          %p185 = pneg %p73
        $region22: #{pool_layer_pallas.1} parent=19 // pred_check_branch
          %187 = sbr.rel (%p185) target = $region24
        $region23: #{pool_layer_pallas.1} parent=19 // pred_region
          %p188 = scmp.lt.s32.totalorder %s20, 1
          %s189 = scalar_select %p188, %s20, 1
          %p190 = scmp.lt.s32.totalorder %s21, 0
          %s191 = scalar_select %p190, %s21, 0
          %s192 = sadd.s32 %s191, %s189
          %s193 = smul.addr %s192, 4
          %s194 = scalar_lea.vmem %s1, %s193
        $region24: #{pool_layer_pallas.1} parent=19 // pred_fallthru
          _
        // Predicated region
        $region25: #{pool_layer_pallas.1} parent=19 // pred_check
          %p195 = pneg %p99
        $region26: #{pool_layer_pallas.1} parent=19 // pred_check_branch
          %197 = sbr.rel (%p195) target = $region28
        $region27: #{pool_layer_pallas.1} parent=19 // pred_region
          %p198 = scmp.lt.s32.totalorder %s20, 1
          %s199 = scalar_select %p198, %s20, 1
          %s200 = smul.addr %s199, 8
          %s201 = scalar_lea.vmem %s2, %s200
        $region28: #{pool_layer_pallas.1} parent=19 // pred_fallthru
          _
        // Predicated region
        $region29: #{pool_layer_pallas.1} parent=19 // pred_check
          %p202 = pneg %p125
        $region30: #{pool_layer_pallas.1} parent=19 // pred_check_branch
          %204 = sbr.rel (%p202) target = $region32
        $region31: #{pool_layer_pallas.1} parent=19 // pred_region
          %p205 = scmp.lt.s32.totalorder %s20, 1
          %s206 = scalar_select %p205, %s20, 1
          %s207 = smul.addr %s206, 2
          %s208 = smul.addr %s207, 8
          %s209 = scalar_lea.vmem %s3, %s208
        $region32: #{pool_layer_pallas.1} parent=19 // pred_fallthru
          _
      $region20: #{pool_layer_pallas.1} parent=5 // pred_fallthru
        _
      %p210 = scmp.le.s32.totalorder 1, %s13
      %p211 = scmp.lt.s32.totalorder %s13, 3
      %p212 = pnand %p210, %p211
      %p213 = pneg %p212
      // Predicated region
      $region33: #{pool_layer_pallas.1} parent=5 // pred_check
        _
      $region34: #{pool_layer_pallas.1} parent=5 // pred_check_branch
        %215 = sbr.rel (%p212) target = $region36
      $region35: #{pool_layer_pallas.1} parent=5 // pred_region
        %s216 = ssub.s32 %s13, 1
        %p217 = scmp.lt.s32.totalorder %s23, 0
        %s218 = scalar_select %p217, %s23, 0
        %s219 = smul.addr %s218, 4
        %s220 = scalar_lea.vmem %s0, %s219
        %p221 = pneg %p51
        %p222 = pneg %p48
        %p223 = scmp.lt.s32.totalorder %s22, 1
        %s224 = scalar_select %p223, %s22, 1
        %p225 = scmp.lt.s32.totalorder %s23, 0
        %s226 = scalar_select %p225, %s23, 0
        %s227 = sadd.s32 %s226, %s224
        %s228 = smul.addr %s227, 4
        %s229 = scalar_lea.vmem %s1, %s228
        %p230 = pneg %p79
        %p231 = pneg %p76
        %p232 = scmp.lt.s32.totalorder %s22, 1
        %s233 = scalar_select %p232, %s22, 1
        %s234 = smul.addr %s233, 8
        %s235 = scalar_lea.vmem %s2, %s234
        %p236 = pneg %p105
        %p237 = pneg %p102
        %p238 = scmp.lt.s32.totalorder %s22, 1
        %s239 = scalar_select %p238, %s22, 1
        %s240 = smul.addr %s239, 2
        %s241 = smul.addr %s240, 8
        %s242 = scalar_lea.vmem %s3, %s241
        %p243 = pneg %p131
        %p244 = pneg %p128
        %p245 = pneg %p159
        %p246 = pneg %p156
        %s247 = sand.u32 %s146, 1
        %s248 = scalar_lea.sflag [#allocation3], %s247
        %s249 = sand.u32 %s146, 1
        %s250 = smul.addr %s249, 4
        %s251 = scalar_lea.vmem [#allocation2], %s250
        %p252 = scmp.lt.s32.totalorder %s23, 0
        %s253 = scalar_select %p252, %s23, 0
        %s254 = smul.addr %s253, 4
        %s255 = scalar_lea.vmem %s0, %s254
        %p256 = scmp.lt.s32.totalorder %s22, 1
        %s257 = scalar_select %p256, %s22, 1
        %p258 = scmp.lt.s32.totalorder %s23, 0
        %s259 = scalar_select %p258, %s23, 0
        %s260 = sadd.s32 %s259, %s257
        %s261 = smul.addr %s260, 4
        %s262 = scalar_lea.vmem %s1, %s261
        %p263 = scmp.lt.s32.totalorder %s22, 1
        %s264 = scalar_select %p263, %s22, 1
        %s265 = smul.addr %s264, 8
        %s266 = scalar_lea.vmem %s2, %s265
        %p267 = scmp.lt.s32.totalorder %s22, 1
        %s268 = scalar_select %p267, %s22, 1
        %s269 = smul.addr %s268, 2
        %s270 = smul.addr %s269, 8
        %s271 = scalar_lea.vmem %s3, %s270
        %v272 = vld [vmem:[%s262] sm:$0xf]
        %v273 = vld [vmem:[%s255] sm:$0xf]
        %v274 = vld [vmem:[%s271] sm:$0xff]
        %v275 = vld [vmem:[%s271 + $0x8] sm:$0xff]
        %v276 = vld [vmem:[%s266] sm:$0x1]
        %v277 = vld [vmem:[%s266 + $0x1] sm:$0x1]
        %v278 = vld [vmem:[%s266 + $0x2] sm:$0x1]
        %v279 = vld [vmem:[%s266 + $0x3] sm:$0x1]
        %281 = vset.pattern.permute.xlu0 0
        %282 = vperm.xlu0 %281, %v272
        %v283 = vpop.permute.xlu0 %282
        %v285 = vlaneseq
        %v286 = vshrl.u32 %v285, 7
        %v287 = vsub.s32 0, %v286
        %v288 = vrot.slane %v276, %v287
        %v289 = vmul.f32 %v283, %v288
        %v290 = vlaneseq
        %v291 = vshrl.u32 %v290, 7
        %v292 = vsub.s32 0, %v291
        %v293 = vrot.slane %v279, %v292
        %v294 = vadd.f32 %v293, %v289
        %295 = vset.pattern.permute.xlu0 1
        %296 = vperm.xlu0 %295, %v272
        %v297 = vpop.permute.xlu0 %296
        %v299 = vlaneseq
        %v300 = vshrl.u32 %v299, 7
        %v301 = vsub.s32 0, %v300
        %v302 = vrot.slane %v277, %v301
        %v303 = vmul.f32 %v297, %v302
        %v304 = vadd.f32 %v294, %v303
        %305 = vset.pattern.permute.xlu0 2
        %306 = vperm.xlu0 %305, %v272
        %v307 = vpop.permute.xlu0 %306
        %v309 = vlaneseq
        %v310 = vshrl.u32 %v309, 7
        %v311 = vsub.s32 0, %v310
        %v312 = vrot.slane %v278, %v311
        %v313 = vmul.f32 %v307, %v312
        %v314 = vadd.f32 %v304, %v313
        %v315 = vlaneseq
        %v316 = vand.u32 %v315, 127
        %317 = vset.pattern.permute.xlu0 0
        %318 = vperm.xlu0 %317, %v273
        %v319 = vpop.permute.xlu0 %318
        %vm320 = vcmp.eq.s32.totalorder %v316, %v319
        %v321 = vsel %vm320, inf, %v314
        %vm322 = vcmask 125952
        %v323 = vsel %vm322, %v321, inf
        %324 = vmin.xlane.f32.xlu0 %v323
        %v325 = vpop.xlane.xlu0 %324
        %vm326 = vcmp.le.f32.partialorder %v321, %v325
        %v327 = vsel %vm326, %v316, 16
        %v328 = vsel %vm322, %v327, 2147483647
        %v329 = vand.u32 %v328, 65535
        %v330 = vshra.s32 %v328, 16
        %v331 = vcvt.s32.f32 %v329
        %v332 = vcvt.s32.f32 %v330
        %333 = vmin.xlane.f32.xlu0 %v332
        %v334 = vpop.xlane.xlu0 %333
        %vm335 = vcmp.eq.f32.partialorder %v332, %v334
        %v336 = vsel %vm335, %v331, inf
        %337 = vmin.xlane.f32.xlu0 %v336
        %v338 = vpop.xlane.xlu0 %337
        %v339 = vcvt.f32.s32 %v338
        %v340 = vcvt.f32.s32 %v334
        %v341 = vshll.u32 %v340, 16
        %v342 = vadd.s32 %v341, %v339
        %vm343 = vcmp.eq.s32.totalorder %v316, %v342
        %v344 = vsel %vm343, 1, 0
        %v345 = vcvt.s32.f32 %v344
        %vm346 = vcmask 130048
        %v348 = vsel %vm346, %v345, 0
        %350 = vmatprep.subr.mxu0 0.0
        %351 = vmatpush1.msra.mxu0 0.0
        %352 = vmatprep.subr.mxu0 0.0
        %353 = vmatpush1.msra.mxu0 0.0
        %354 = vmatprep.subr.mxu0 0.0
        %355 = vmatpush1.msra.mxu0 0.0
        %356 = vmatprep.subr.mxu0 0.0
        %357 = vmatpush1.msra.mxu0 0.0
        %358 = vmatprep.subr.mxu0 0.0
        %359 = vmatpush1.msra.mxu0 0.0
        %360 = vmatprep.subr.mxu0 0.0
        %361 = vmatpush1.msra.mxu0 0.0
        %362 = vmatprep.subr.mxu0 0.0
        %363 = vmatpush1.msra.mxu0 0.0
        %364 = vmatprep.subr.mxu0 0.0
        %365 = vmatpush1.msra.mxu0 0.0
        %366 = vmatprep.subr.mxu0 0.0
        %367 = vmatpush1.msra.mxu0 0.0
        %368 = vmatprep.subr.mxu0 0.0
        %369 = vmatpush1.msra.mxu0 0.0
        %370 = vmatprep.subr.mxu0 0.0
        %371 = vmatpush1.msra.mxu0 0.0
        %372 = vmatprep.subr.mxu0 0.0
        %373 = vmatpush1.msra.mxu0 0.0
        %374 = vmatprep.subr.mxu0 0.0
        %375 = vmatpush1.msra.mxu0 0.0
        %376 = vmatprep.subr.mxu0 0.0
        %377 = vmatpush1.msra.mxu0 0.0
        %378 = vmatprep.subr.mxu0 0.0
        %379 = vmatpush1.msra.mxu0 %v275
        %380 = vmatprep.subr.mxu0 0.0
        %381 = vmatpush1.msra.mxu0 %v274
        %382 = vmatprep.subr.mxu0 0.0
        %383 = vmatpush2.msra.mxu0 0.0
        %384 = vmatprep.subr.mxu0 0.0
        %385 = vmatpush2.msra.mxu0 0.0
        %386 = vmatprep.subr.mxu0 0.0
        %387 = vmatpush2.msra.mxu0 0.0
        %388 = vmatprep.subr.mxu0 0.0
        %389 = vmatpush2.msra.mxu0 0.0
        %390 = vmatprep.subr.mxu0 0.0
        %391 = vmatpush2.msra.mxu0 0.0
        %392 = vmatprep.subr.mxu0 0.0
        %393 = vmatpush2.msra.mxu0 0.0
        %394 = vmatprep.subr.mxu0 0.0
        %395 = vmatpush2.msra.mxu0 0.0
        %396 = vmatprep.subr.mxu0 0.0
        %397 = vmatpush2.msra.mxu0 0.0
        %398 = vmatprep.subr.mxu0 0.0
        %399 = vmatpush2.msra.mxu0 0.0
        %400 = vmatprep.subr.mxu0 0.0
        %401 = vmatpush2.msra.mxu0 0.0
        %402 = vmatprep.subr.mxu0 0.0
        %403 = vmatpush2.msra.mxu0 0.0
        %404 = vmatprep.subr.mxu0 0.0
        %405 = vmatpush2.msra.mxu0 0.0
        %406 = vmatprep.subr.mxu0 0.0
        %407 = vmatpush2.msra.mxu0 0.0
        %408 = vmatprep.subr.mxu0 0.0
        %409 = vmatpush2.msra.mxu0 0.0
        %410 = vmatprep.subr.mxu0 0.0
        %411 = vmatpush2.msra.mxu0 0.0
        %412 = vmatprep.subr.mxu0 0.0
        %413 = vmatpush2.msra.mxu0 0.0
        %414 = vmatprep.mubr.f32.mxu0 0.0
        %415 = vmatmul.mubr.f32.gmra.mxu0 %v348
        %v416 = vpop.f32.mrf.mxu0
        %v417 = vadd.f32 0.0, %v416
        %v418 = vpop.f32.mrf.mxu0
        %419 = vdwg.mxu0
        %v420 = vsel %vm343, inf, %v321
        %v421 = vsel %vm322, %v420, inf
        %422 = vmin.xlane.f32.xlu0 %v421
        %v423 = vpop.xlane.xlu0 %422
        %vm424 = vcmp.le.f32.partialorder %v420, %v423
        %v425 = vsel %vm424, %v316, 16
        %v426 = vsel %vm322, %v425, 2147483647
        %v427 = vand.u32 %v426, 65535
        %v428 = vshra.s32 %v426, 16
        %v429 = vcvt.s32.f32 %v427
        %v430 = vcvt.s32.f32 %v428
        %431 = vmin.xlane.f32.xlu0 %v430
        %v432 = vpop.xlane.xlu0 %431
        %vm433 = vcmp.eq.f32.partialorder %v430, %v432
        %v434 = vsel %vm433, %v429, inf
        %435 = vmin.xlane.f32.xlu0 %v434
        %v436 = vpop.xlane.xlu0 %435
        %v437 = vcvt.f32.s32 %v436
        %v438 = vcvt.f32.s32 %v432
        %v439 = vshll.u32 %v438, 16
        %v440 = vadd.s32 %v439, %v437
        %vm441 = vcmp.eq.s32.totalorder %v316, %v440
        %v442 = vsel %vm441, 1, 0
        %v443 = vcvt.s32.f32 %v442
        %v445 = vsel %vm346, %v443, 0
        %447 = vmatprep.subr.mxu0 0.0
        %448 = vmatpush1.msra.mxu0 0.0
        %449 = vmatprep.subr.mxu0 0.0
        %450 = vmatpush1.msra.mxu0 0.0
        %451 = vmatprep.subr.mxu0 0.0
        %452 = vmatpush1.msra.mxu0 0.0
        %453 = vmatprep.subr.mxu0 0.0
        %454 = vmatpush1.msra.mxu0 0.0
        %455 = vmatprep.subr.mxu0 0.0
        %456 = vmatpush1.msra.mxu0 0.0
        %457 = vmatprep.subr.mxu0 0.0
        %458 = vmatpush1.msra.mxu0 0.0
        %459 = vmatprep.subr.mxu0 0.0
        %460 = vmatpush1.msra.mxu0 0.0
        %461 = vmatprep.subr.mxu0 0.0
        %462 = vmatpush1.msra.mxu0 0.0
        %463 = vmatprep.subr.mxu0 0.0
        %464 = vmatpush1.msra.mxu0 0.0
        %465 = vmatprep.subr.mxu0 0.0
        %466 = vmatpush1.msra.mxu0 0.0
        %467 = vmatprep.subr.mxu0 0.0
        %468 = vmatpush1.msra.mxu0 0.0
        %469 = vmatprep.subr.mxu0 0.0
        %470 = vmatpush1.msra.mxu0 0.0
        %471 = vmatprep.subr.mxu0 0.0
        %472 = vmatpush1.msra.mxu0 0.0
        %473 = vmatprep.subr.mxu0 0.0
        %474 = vmatpush1.msra.mxu0 0.0
        %475 = vmatprep.subr.mxu0 0.0
        %476 = vmatpush1.msra.mxu0 %v275
        %477 = vmatprep.subr.mxu0 0.0
        %478 = vmatpush1.msra.mxu0 %v274
        %479 = vmatprep.subr.mxu0 0.0
        %480 = vmatpush2.msra.mxu0 0.0
        %481 = vmatprep.subr.mxu0 0.0
        %482 = vmatpush2.msra.mxu0 0.0
        %483 = vmatprep.subr.mxu0 0.0
        %484 = vmatpush2.msra.mxu0 0.0
        %485 = vmatprep.subr.mxu0 0.0
        %486 = vmatpush2.msra.mxu0 0.0
        %487 = vmatprep.subr.mxu0 0.0
        %488 = vmatpush2.msra.mxu0 0.0
        %489 = vmatprep.subr.mxu0 0.0
        %490 = vmatpush2.msra.mxu0 0.0
        %491 = vmatprep.subr.mxu0 0.0
        %492 = vmatpush2.msra.mxu0 0.0
        %493 = vmatprep.subr.mxu0 0.0
        %494 = vmatpush2.msra.mxu0 0.0
        %495 = vmatprep.subr.mxu0 0.0
        %496 = vmatpush2.msra.mxu0 0.0
        %497 = vmatprep.subr.mxu0 0.0
        %498 = vmatpush2.msra.mxu0 0.0
        %499 = vmatprep.subr.mxu0 0.0
        %500 = vmatpush2.msra.mxu0 0.0
        %501 = vmatprep.subr.mxu0 0.0
        %502 = vmatpush2.msra.mxu0 0.0
        %503 = vmatprep.subr.mxu0 0.0
        %504 = vmatpush2.msra.mxu0 0.0
        %505 = vmatprep.subr.mxu0 0.0
        %506 = vmatpush2.msra.mxu0 0.0
        %507 = vmatprep.subr.mxu0 0.0
        %508 = vmatpush2.msra.mxu0 0.0
        %509 = vmatprep.subr.mxu0 0.0
        %510 = vmatpush2.msra.mxu0 0.0
        %511 = vmatprep.mubr.f32.mxu0 0.0
        %512 = vmatmul.mubr.f32.gmra.mxu0 %v445
        %v513 = vpop.f32.mrf.mxu0
        %v514 = vadd.f32 0.0, %v513
        %v515 = vpop.f32.mrf.mxu0
        %516 = vdwg.mxu0
        %v517 = vmax.f32 %v417, %v514
        %v518 = vsel %vm441, inf, %v420
        %v519 = vsel %vm322, %v518, inf
        %520 = vmin.xlane.f32.xlu0 %v519
        %v521 = vpop.xlane.xlu0 %520
        %vm522 = vcmp.le.f32.partialorder %v518, %v521
        %v523 = vsel %vm522, %v316, 16
        %v524 = vsel %vm322, %v523, 2147483647
        %v525 = vand.u32 %v524, 65535
        %v526 = vshra.s32 %v524, 16
        %v527 = vcvt.s32.f32 %v525
        %v528 = vcvt.s32.f32 %v526
        %529 = vmin.xlane.f32.xlu0 %v528
        %v530 = vpop.xlane.xlu0 %529
        %vm531 = vcmp.eq.f32.partialorder %v528, %v530
        %v532 = vsel %vm531, %v527, inf
        %533 = vmin.xlane.f32.xlu0 %v532
        %v534 = vpop.xlane.xlu0 %533
        %v535 = vcvt.f32.s32 %v534
        %v536 = vcvt.f32.s32 %v530
        %v537 = vshll.u32 %v536, 16
        %v538 = vadd.s32 %v537, %v535
        %vm539 = vcmp.eq.s32.totalorder %v316, %v538
        %v540 = vsel %vm539, 1, 0
        %v541 = vcvt.s32.f32 %v540
        %v543 = vsel %vm346, %v541, 0
        %545 = vmatprep.subr.mxu0 0.0
        %546 = vmatpush1.msra.mxu0 0.0
        %547 = vmatprep.subr.mxu0 0.0
        %548 = vmatpush1.msra.mxu0 0.0
        %549 = vmatprep.subr.mxu0 0.0
        %550 = vmatpush1.msra.mxu0 0.0
        %551 = vmatprep.subr.mxu0 0.0
        %552 = vmatpush1.msra.mxu0 0.0
        %553 = vmatprep.subr.mxu0 0.0
        %554 = vmatpush1.msra.mxu0 0.0
        %555 = vmatprep.subr.mxu0 0.0
        %556 = vmatpush1.msra.mxu0 0.0
        %557 = vmatprep.subr.mxu0 0.0
        %558 = vmatpush1.msra.mxu0 0.0
        %559 = vmatprep.subr.mxu0 0.0
        %560 = vmatpush1.msra.mxu0 0.0
        %561 = vmatprep.subr.mxu0 0.0
        %562 = vmatpush1.msra.mxu0 0.0
        %563 = vmatprep.subr.mxu0 0.0
        %564 = vmatpush1.msra.mxu0 0.0
        %565 = vmatprep.subr.mxu0 0.0
        %566 = vmatpush1.msra.mxu0 0.0
        %567 = vmatprep.subr.mxu0 0.0
        %568 = vmatpush1.msra.mxu0 0.0
        %569 = vmatprep.subr.mxu0 0.0
        %570 = vmatpush1.msra.mxu0 0.0
        %571 = vmatprep.subr.mxu0 0.0
        %572 = vmatpush1.msra.mxu0 0.0
        %573 = vmatprep.subr.mxu0 0.0
        %574 = vmatpush1.msra.mxu0 %v275
        %575 = vmatprep.subr.mxu0 0.0
        %576 = vmatpush1.msra.mxu0 %v274
        %577 = vmatprep.subr.mxu0 0.0
        %578 = vmatpush2.msra.mxu0 0.0
        %579 = vmatprep.subr.mxu0 0.0
        %580 = vmatpush2.msra.mxu0 0.0
        %581 = vmatprep.subr.mxu0 0.0
        %582 = vmatpush2.msra.mxu0 0.0
        %583 = vmatprep.subr.mxu0 0.0
        %584 = vmatpush2.msra.mxu0 0.0
        %585 = vmatprep.subr.mxu0 0.0
        %586 = vmatpush2.msra.mxu0 0.0
        %587 = vmatprep.subr.mxu0 0.0
        %588 = vmatpush2.msra.mxu0 0.0
        %589 = vmatprep.subr.mxu0 0.0
        %590 = vmatpush2.msra.mxu0 0.0
        %591 = vmatprep.subr.mxu0 0.0
        %592 = vmatpush2.msra.mxu0 0.0
        %593 = vmatprep.subr.mxu0 0.0
        %594 = vmatpush2.msra.mxu0 0.0
        %595 = vmatprep.subr.mxu0 0.0
        %596 = vmatpush2.msra.mxu0 0.0
        %597 = vmatprep.subr.mxu0 0.0
        %598 = vmatpush2.msra.mxu0 0.0
        %599 = vmatprep.subr.mxu0 0.0
        %600 = vmatpush2.msra.mxu0 0.0
        %601 = vmatprep.subr.mxu0 0.0
        %602 = vmatpush2.msra.mxu0 0.0
        %603 = vmatprep.subr.mxu0 0.0
        %604 = vmatpush2.msra.mxu0 0.0
        %605 = vmatprep.subr.mxu0 0.0
        %606 = vmatpush2.msra.mxu0 0.0
        %607 = vmatprep.subr.mxu0 0.0
        %608 = vmatpush2.msra.mxu0 0.0
        %609 = vmatprep.mubr.f32.mxu0 0.0
        %610 = vmatmul.mubr.f32.gmra.mxu0 %v543
        %v611 = vpop.f32.mrf.mxu0
        %v612 = vadd.f32 0.0, %v611
        %v613 = vpop.f32.mrf.mxu0
        %614 = vdwg.mxu0
        %v615 = vmax.f32 %v517, %v612
        %v616 = vsel %vm539, inf, %v518
        %v617 = vsel %vm322, %v616, inf
        %618 = vmin.xlane.f32.xlu0 %v617
        %v619 = vpop.xlane.xlu0 %618
        %vm620 = vcmp.le.f32.partialorder %v616, %v619
        %v621 = vsel %vm620, %v316, 16
        %v622 = vsel %vm322, %v621, 2147483647
        %v623 = vand.u32 %v622, 65535
        %v624 = vshra.s32 %v622, 16
        %v625 = vcvt.s32.f32 %v623
        %v626 = vcvt.s32.f32 %v624
        %627 = vmin.xlane.f32.xlu0 %v626
        %v628 = vpop.xlane.xlu0 %627
        %vm629 = vcmp.eq.f32.partialorder %v626, %v628
        %v630 = vsel %vm629, %v625, inf
        %631 = vmin.xlane.f32.xlu0 %v630
        %v632 = vpop.xlane.xlu0 %631
        %v633 = vcvt.f32.s32 %v632
        %v634 = vcvt.f32.s32 %v628
        %v635 = vshll.u32 %v634, 16
        %v636 = vadd.s32 %v635, %v633
        %vm637 = vcmp.eq.s32.totalorder %v316, %v636
        %v638 = vsel %vm637, 1, 0
        %v639 = vcvt.s32.f32 %v638
        %v641 = vsel %vm346, %v639, 0
        %643 = vmatprep.subr.mxu0 0.0
        %644 = vmatpush1.msra.mxu0 0.0
        %645 = vmatprep.subr.mxu0 0.0
        %646 = vmatpush1.msra.mxu0 0.0
        %647 = vmatprep.subr.mxu0 0.0
        %648 = vmatpush1.msra.mxu0 0.0
        %649 = vmatprep.subr.mxu0 0.0
        %650 = vmatpush1.msra.mxu0 0.0
        %651 = vmatprep.subr.mxu0 0.0
        %652 = vmatpush1.msra.mxu0 0.0
        %653 = vmatprep.subr.mxu0 0.0
        %654 = vmatpush1.msra.mxu0 0.0
        %655 = vmatprep.subr.mxu0 0.0
        %656 = vmatpush1.msra.mxu0 0.0
        %657 = vmatprep.subr.mxu0 0.0
        %658 = vmatpush1.msra.mxu0 0.0
        %659 = vmatprep.subr.mxu0 0.0
        %660 = vmatpush1.msra.mxu0 0.0
        %661 = vmatprep.subr.mxu0 0.0
        %662 = vmatpush1.msra.mxu0 0.0
        %663 = vmatprep.subr.mxu0 0.0
        %664 = vmatpush1.msra.mxu0 0.0
        %665 = vmatprep.subr.mxu0 0.0
        %666 = vmatpush1.msra.mxu0 0.0
        %667 = vmatprep.subr.mxu0 0.0
        %668 = vmatpush1.msra.mxu0 0.0
        %669 = vmatprep.subr.mxu0 0.0
        %670 = vmatpush1.msra.mxu0 0.0
        %671 = vmatprep.subr.mxu0 0.0
        %672 = vmatpush1.msra.mxu0 %v275
        %673 = vmatprep.subr.mxu0 0.0
        %674 = vmatpush1.msra.mxu0 %v274
        %675 = vmatprep.subr.mxu0 0.0
        %676 = vmatpush2.msra.mxu0 0.0
        %677 = vmatprep.subr.mxu0 0.0
        %678 = vmatpush2.msra.mxu0 0.0
        %679 = vmatprep.subr.mxu0 0.0
        %680 = vmatpush2.msra.mxu0 0.0
        %681 = vmatprep.subr.mxu0 0.0
        %682 = vmatpush2.msra.mxu0 0.0
        %683 = vmatprep.subr.mxu0 0.0
        %684 = vmatpush2.msra.mxu0 0.0
        %685 = vmatprep.subr.mxu0 0.0
        %686 = vmatpush2.msra.mxu0 0.0
        %687 = vmatprep.subr.mxu0 0.0
        %688 = vmatpush2.msra.mxu0 0.0
        %689 = vmatprep.subr.mxu0 0.0
        %690 = vmatpush2.msra.mxu0 0.0
        %691 = vmatprep.subr.mxu0 0.0
        %692 = vmatpush2.msra.mxu0 0.0
        %693 = vmatprep.subr.mxu0 0.0
        %694 = vmatpush2.msra.mxu0 0.0
        %695 = vmatprep.subr.mxu0 0.0
        %696 = vmatpush2.msra.mxu0 0.0
        %697 = vmatprep.subr.mxu0 0.0
        %698 = vmatpush2.msra.mxu0 0.0
        %699 = vmatprep.subr.mxu0 0.0
        %700 = vmatpush2.msra.mxu0 0.0
        %701 = vmatprep.subr.mxu0 0.0
        %702 = vmatpush2.msra.mxu0 0.0
        %703 = vmatprep.subr.mxu0 0.0
        %704 = vmatpush2.msra.mxu0 0.0
        %705 = vmatprep.subr.mxu0 0.0
        %706 = vmatpush2.msra.mxu0 0.0
        %707 = vmatprep.mubr.f32.mxu0 0.0
        %708 = vmatmul.mubr.f32.gmra.mxu0 %v641
        %v709 = vpop.f32.mrf.mxu0
        %v710 = vadd.f32 0.0, %v709
        %v711 = vpop.f32.mrf.mxu0
        %712 = vdwg.mxu0
        %v713 = vmax.f32 %v615, %v710
        %vm714 = vcmask 257024
        %715 = vst.msk [vmem:[%s251] sm:$0xf] %vm714, %v713
        %s716 = sand.u32 %s146, 1
        %s717 = scalar_lea.sflag [#allocation3], %s716
        %s718 = sand.u32 %s146, 1
        %s719 = smul.addr %s718, 4
        %s720 = scalar_lea.vmem [#allocation2], %s719
        // Predicated region
        $region37: #{pool_layer_pallas.1} parent=35 // pred_check
          %p721 = pneg %p156
        $region38: #{pool_layer_pallas.1} parent=35 // pred_check_branch
          %723 = sbr.rel (%p721) target = $region40
        $region39: #{pool_layer_pallas.1} parent=35 // pred_region
          %s725 = ssub.s32 64, 64
          %726 = vsyncadd %s717, %s725
          %s727 = sadd.s32 %s23, %s22
          %s728 = smul.addr %s727, 64
          %s729 = scalar_lea.hbm %s4, %s728
          %s731 = sshll.u32 %s720, 4
          %s732 = int_to_ptr.vmem [resolvable:$true] %s731
          %734 = dma.vmem_to_hbm [thread:$0]  %s732, 64, %s729, %s717
        $region40: #{pool_layer_pallas.1} parent=35 // pred_fallthru
          _
      $region36: #{pool_layer_pallas.1} parent=5 // pred_fallthru
        _
      %p735 = scmp.le.s32.totalorder 2, %s13
      // Predicated region
      $region41: #{pool_layer_pallas.1} parent=5 // pred_check
        %p736 = pneg %p735
      $region42: #{pool_layer_pallas.1} parent=5 // pred_check_branch
        %738 = sbr.rel (%p736) target = $region44
      $region43: #{pool_layer_pallas.1} parent=5 // pred_region
        %s739 = ssub.s32 %s13, 2
        // Predicated region
        $region45: #{pool_layer_pallas.1} parent=43 // pred_check
          %p740 = pneg %p162
        $region46: #{pool_layer_pallas.1} parent=43 // pred_check_branch
          %742 = sbr.rel (%p740) target = $region48
        $region47: #{pool_layer_pallas.1} parent=43 // pred_region
          %s743 = sand.u32 %s147, 1
          %s744 = scalar_lea.sflag [#allocation3], %s743
          %s745 = sand.u32 %s147, 1
          %s746 = smul.addr %s745, 4
          %s747 = scalar_lea.vmem [#allocation2], %s746
          %748 = dma.done %s744, 64
        $region48: #{pool_layer_pallas.1} parent=43 // pred_fallthru
          _
      $region44: #{pool_layer_pallas.1} parent=5 // pred_fallthru
        _
    $region6: #{pool_layer_pallas.1} parent=1 // loop_footer
      %s17 = sadd.s32 1, %s13
    $region7: #{pool_layer_pallas.1} parent=1 // loop_footer_branch
      %12 = sbr.rel target = $region3
    $region8: #{pool_layer_pallas.1} parent=1 // loop_exit
      _
    %749 = vsyncpa [#allocation3], 1
    %s750 = scalar_lea.sflag [#allocation3], 1
    %751 = vsyncpa %s750, 1

</llo_original>
